<compile_context>
chip_gen: v6e
topology: v6e:2x2x1
jax: 0.10.0
libtpu: 0.0.40
codegen_flags: <defaults>
</compile_context>

<pallas_src>
import numpy as np
import jax
import jax.numpy as jnp
from jax import lax
from jax.experimental import pallas as pl
from jax.experimental.pallas import tpu as pltpu


def gru_fc_kernel(x_ref, feat_ref, w_ih_ref, w_hh_ref, b_ih_ref, b_hh_ref,
                  wf_ref, w0_ref, fc_b_ref, h0_ref, out_ref):
    # x_ref:    (I, T*B)    input sequence, lane index = t*B + b
    # feat_ref: (Fm1, T, B) extra features, channel-major
    # w_ih:     (3, I)  w_hh: (3, 1)  b_ih: (3, 1)  b_hh: (3, 1)   (gate order r,z,n)
    # wf:       (Fm1, 1, 1)  FC weights on the feature channels
    # w0:       (1, 1)       FC weight on the GRU output channel
    # fc_b:     (1, 1)       FC bias
    # h0:       (1, B)       initial hidden state
    # out_ref:  (T, B)
    T, B = out_ref.shape

    # ---------- hoisted, h-independent work (off the serial chain) ----------
    # Input projection for ALL time steps: one MXU matmul.
    gx_all = jnp.dot(w_ih_ref[...], x_ref[...],
                     preferred_element_type=jnp.float32) + b_ih_ref[...]    # (3, T*B)

    # fc(concat([., feature])) feature term for ALL time steps: pure VPU adds
    # over the (small) leading channel axis.
    fc_pre = jnp.sum(wf_ref[...] * feat_ref[...], axis=0)                   # (T, B)

    w_hh = w_hh_ref[...]                              # (3, 1)
    b_hh = b_hh_ref[...]                              # (3, 1)
    wr, wz, wn = w_hh[0:1, :], w_hh[1:2, :], w_hh[2:3, :]
    br, bz, bn = b_hh[0:1, :], b_hh[1:2, :], b_hh[2:3, :]

    # ---------- serial recurrence: h kept in vregs, fully unrolled ----------
    h = h0_ref[...]                                   # (1, B)
    hs = []
    for t in range(T):                                # T is static -> unrolled
        gx_t = gx_all[:, t * B:(t + 1) * B]           # (3, B) static lane slice
        r = jax.nn.sigmoid(gx_t[0:1, :] + h * wr + br)
        z = jax.nn.sigmoid(gx_t[1:2, :] + h * wz + bz)
        n = jnp.tanh(gx_t[2:3, :] + r * (h * wn + bn))
        h = (1.0 - z) * n + z * h                     # (1, B)
        hs.append(h)

    h_all = jnp.concatenate(hs, axis=0)               # (T, B)

    # Fused fc(concat([gru_out, feature])): one lane-dense epilogue store.
    out_ref[...] = h_all * w0_ref[...] + fc_pre + fc_b_ref[...]


def gru_forward(x, feature, params, hidden=None):
    """x: (B, T, input_size), feature: (B, T, feature_size-1) -> (B, T, 1)."""
    w_ih, w_hh, b_ih, b_hh, fc_w, fc_b = params
    B, T, I = x.shape
    Fm1 = feature.shape[-1]

    if hidden is None:
        h0 = jnp.ones((1, B), jnp.float32)            # matches x.new(...).fill_(1)
    else:
        h0 = jnp.asarray(hidden, jnp.float32).reshape(1, B)

    # Time*batch on the lane axis (lane index = t*B + b); feature channel-major.
    x_lanes = jnp.transpose(x.astype(jnp.float32), (2, 1, 0)).reshape(I, T * B)
    feat_cm = jnp.transpose(feature.astype(jnp.float32), (2, 1, 0))         # (Fm1, T, B)

    w_ih_a = jnp.asarray(w_ih, jnp.float32).reshape(3, I)                   # (3, I)
    w_hh_a = jnp.asarray(w_hh, jnp.float32).reshape(3, 1)                   # (3, 1)
    b_ih_a = jnp.asarray(b_ih, jnp.float32).reshape(3, 1)
    b_hh_a = jnp.asarray(b_hh, jnp.float32).reshape(3, 1)
    fc_w_a = jnp.asarray(fc_w, jnp.float32).reshape(-1)                     # (F,)
    w0 = fc_w_a[0].reshape(1, 1)                                            # GRU-out weight
    wf = fc_w_a[1:].reshape(Fm1, 1, 1)                                      # feature weights
    fc_b_a = jnp.asarray(fc_b, jnp.float32).reshape(1, 1)

    out_tb = pl.pallas_call(
        gru_fc_kernel,
        out_shape=jax.ShapeDtypeStruct((T, B), jnp.float32),
        in_specs=[pl.BlockSpec(memory_space=pltpu.MemorySpace.VMEM)] * 10,
        out_specs=pl.BlockSpec(memory_space=pltpu.MemorySpace.VMEM),
    )(x_lanes, feat_cm, w_ih_a, w_hh_a, b_ih_a, b_hh_a, wf, w0, fc_b_a, h0)

    return jnp.transpose(out_tb)[:, :, None]                                # (B, T, 1)


def gru_forward_ref(x, feature, params, hidden=None):
    """Pure-JAX reference of the PyTorch forward."""
    w_ih, w_hh, b_ih, b_hh, fc_w, fc_b = [jnp.asarray(p, jnp.float32) for p in params]
    B, T, I = x.shape
    h0 = jnp.ones((B, 1), jnp.float32) if hidden is None else hidden.reshape(B, 1)

    def step(h, xt):
        gx = xt @ w_ih.T + b_ih
        gh = h @ w_hh.T + b_hh
        r = jax.nn.sigmoid(gx[:, 0:1] + gh[:, 0:1])
        z = jax.nn.sigmoid(gx[:, 1:2] + gh[:, 1:2])
        n = jnp.tanh(gx[:, 2:3] + r * gh[:, 2:3])
        h_new = (1.0 - z) * n + z * h
        return h_new, h_new

    _, hs = lax.scan(step, h0, jnp.transpose(x, (1, 0, 2)).astype(jnp.float32))
    output = jnp.transpose(hs, (1, 0, 2))                                   # (B, T, 1)
    combined = jnp.concatenate([output, feature.astype(jnp.float32)], axis=-1)
    return combined @ fc_w.T + fc_b


if __name__ == "__main__":
    B, T = 2, 8
    input_size, feature_size, hidden_size = 5, 7, 1

    key = jax.random.PRNGKey(0)
    ks = jax.random.split(key, 8)
    # Deterministic parameter init (shapes match nn.GRU(5, 1, 1) + nn.Linear(7, 1)).
    w_ih = jax.random.uniform(ks[0], (3 * hidden_size, input_size), minval=-1.0, maxval=1.0)
    w_hh = jax.random.uniform(ks[1], (3 * hidden_size, hidden_size), minval=-1.0, maxval=1.0)
    b_ih = jax.random.uniform(ks[2], (3 * hidden_size,), minval=-1.0, maxval=1.0)
    b_hh = jax.random.uniform(ks[3], (3 * hidden_size,), minval=-1.0, maxval=1.0)
    fc_w = jax.random.uniform(ks[4], (1, feature_size), minval=-0.5, maxval=0.5)
    fc_b = jax.random.uniform(ks[5], (1,), minval=-0.5, maxval=0.5)
    params = (w_ih, w_hh, b_ih, b_hh, fc_w, fc_b)

    x = jax.random.normal(ks[6], (B, T, input_size), dtype=jnp.float32)
    feature = jax.random.normal(ks[7], (B, T, feature_size - 1), dtype=jnp.float32)

    out = gru_forward(x, feature, params)
    out = jax.block_until_ready(out)

    ref = jax.block_until_ready(gru_forward_ref(x, feature, params))
    np.testing.assert_allclose(np.asarray(out), np.asarray(ref), rtol=1e-4, atol=1e-4)
    assert out.shape == (B, T, 1)

    print("KERNEL_OK")
</pallas_src>

<mosaic_0001>
module attributes {stable_mosaic.version = 11 : i64} {
  func.func @gru_fc_kernel(%arg0: memref<5x16xf32, #tpu.memory_space<vmem>>, %arg1: memref<6x8x2xf32, #tpu.memory_space<vmem>>, %arg2: memref<3x5xf32, #tpu.memory_space<vmem>>, %arg3: memref<3x1xf32, #tpu.memory_space<vmem>>, %arg4: memref<3x1xf32, #tpu.memory_space<vmem>>, %arg5: memref<3x1xf32, #tpu.memory_space<vmem>>, %arg6: memref<6x1x1xf32, #tpu.memory_space<vmem>>, %arg7: memref<1x1xf32, #tpu.memory_space<vmem>>, %arg8: memref<1x1xf32, #tpu.memory_space<vmem>>, %arg9: memref<1x2xf32, #tpu.memory_space<vmem>>, %arg10: memref<8x2xf32, #tpu.memory_space<vmem>>) attributes {dimension_semantics = [], scalar_prefetch = 0 : i64, scratch_operands = 0 : i64, tpu.core_type = #tpu.core_type<tc>} {
    %c0 = arith.constant 0 : index
    %c0_0 = arith.constant 0 : index
    %0 = vector.load %arg2[%c0, %c0_0] : memref<3x5xf32, #tpu.memory_space<vmem>>, vector<3x5xf32>
    %c0_1 = arith.constant 0 : index
    %c0_2 = arith.constant 0 : index
    %1 = vector.load %arg0[%c0_1, %c0_2] : memref<5x16xf32, #tpu.memory_space<vmem>>, vector<5x16xf32>
    %cst = arith.constant dense<0.000000e+00> : vector<3x16xf32>
    %2 = tpu.matmul %0, %1, %cst {dimension_numbers = #tpu.dot_dimension_numbers<[1], [0], [0], [1], [0, 0, 1, 1], [], []>} : vector<3x5xf32>, vector<5x16xf32>, vector<3x16xf32> -> vector<3x16xf32>
    %c0_3 = arith.constant 0 : index
    %c0_4 = arith.constant 0 : index
    %3 = vector.load %arg4[%c0_3, %c0_4] : memref<3x1xf32, #tpu.memory_space<vmem>>, vector<3x1xf32>
    %4 = vector.broadcast %3 : vector<3x1xf32> to vector<3x16xf32>
    %5 = arith.addf %2, %4 : vector<3x16xf32>
    %c0_5 = arith.constant 0 : index
    %c0_6 = arith.constant 0 : index
    %c0_7 = arith.constant 0 : index
    %6 = vector.load %arg6[%c0_5, %c0_6, %c0_7] : memref<6x1x1xf32, #tpu.memory_space<vmem>>, vector<6x1x1xf32>
    %c0_8 = arith.constant 0 : index
    %c0_9 = arith.constant 0 : index
    %c0_10 = arith.constant 0 : index
    %7 = vector.load %arg1[%c0_8, %c0_9, %c0_10] : memref<6x8x2xf32, #tpu.memory_space<vmem>>, vector<6x8x2xf32>
    %8 = vector.broadcast %6 : vector<6x1x1xf32> to vector<6x8x2xf32>
    %9 = arith.mulf %8, %7 : vector<6x8x2xf32>
    %cst_11 = arith.constant dense<0.000000e+00> : vector<8x2xf32>
    %10 = vector.multi_reduction <add>, %9, %cst_11 [0] : vector<6x8x2xf32> to vector<8x2xf32>
    %c0_12 = arith.constant 0 : index
    %c0_13 = arith.constant 0 : index
    %11 = vector.load %arg3[%c0_12, %c0_13] : memref<3x1xf32, #tpu.memory_space<vmem>>, vector<3x1xf32>
    %c0_14 = arith.constant 0 : index
    %c0_15 = arith.constant 0 : index
    %12 = vector.load %arg5[%c0_14, %c0_15] : memref<3x1xf32, #tpu.memory_space<vmem>>, vector<3x1xf32>
    %13 = vector.extract_strided_slice %11 {offsets = [0, 0], sizes = [1, 1], strides = [1, 1]} : vector<3x1xf32> to vector<1x1xf32>
    %14 = vector.extract_strided_slice %11 {offsets = [1, 0], sizes = [1, 1], strides = [1, 1]} : vector<3x1xf32> to vector<1x1xf32>
    %15 = vector.extract_strided_slice %11 {offsets = [2, 0], sizes = [1, 1], strides = [1, 1]} : vector<3x1xf32> to vector<1x1xf32>
    %16 = vector.extract_strided_slice %12 {offsets = [0, 0], sizes = [1, 1], strides = [1, 1]} : vector<3x1xf32> to vector<1x1xf32>
    %17 = vector.extract_strided_slice %12 {offsets = [1, 0], sizes = [1, 1], strides = [1, 1]} : vector<3x1xf32> to vector<1x1xf32>
    %18 = vector.extract_strided_slice %12 {offsets = [2, 0], sizes = [1, 1], strides = [1, 1]} : vector<3x1xf32> to vector<1x1xf32>
    %c0_16 = arith.constant 0 : index
    %c0_17 = arith.constant 0 : index
    %19 = vector.load %arg9[%c0_16, %c0_17] : memref<1x2xf32, #tpu.memory_space<vmem>>, vector<1x2xf32>
    %20 = vector.extract_strided_slice %5 {offsets = [0, 0], sizes = [3, 2], strides = [1, 1]} : vector<3x16xf32> to vector<3x2xf32>
    %21 = vector.extract_strided_slice %20 {offsets = [0, 0], sizes = [1, 2], strides = [1, 1]} : vector<3x2xf32> to vector<1x2xf32>
    %22 = vector.broadcast %13 : vector<1x1xf32> to vector<1x2xf32>
    %23 = arith.mulf %19, %22 : vector<1x2xf32>
    %24 = arith.addf %21, %23 : vector<1x2xf32>
    %25 = vector.broadcast %16 : vector<1x1xf32> to vector<1x2xf32>
    %26 = arith.addf %24, %25 : vector<1x2xf32>
    %27 = arith.negf %26 : vector<1x2xf32>
    %28 = math.exp %27 : vector<1x2xf32>
    %cst_18 = arith.constant 1.000000e+00 : f32
    %29 = vector.broadcast %cst_18 : f32 to vector<1x2xf32>
    %30 = arith.addf %29, %28 : vector<1x2xf32>
    %31 = arith.divf %29, %30 : vector<1x2xf32>
    %32 = vector.extract_strided_slice %20 {offsets = [1, 0], sizes = [1, 2], strides = [1, 1]} : vector<3x2xf32> to vector<1x2xf32>
    %33 = vector.broadcast %14 : vector<1x1xf32> to vector<1x2xf32>
    %34 = arith.mulf %19, %33 : vector<1x2xf32>
    %35 = arith.addf %32, %34 : vector<1x2xf32>
    %36 = vector.broadcast %17 : vector<1x1xf32> to vector<1x2xf32>
    %37 = arith.addf %35, %36 : vector<1x2xf32>
    %38 = arith.negf %37 : vector<1x2xf32>
    %39 = math.exp %38 : vector<1x2xf32>
    %cst_19 = arith.constant 1.000000e+00 : f32
    %40 = vector.broadcast %cst_19 : f32 to vector<1x2xf32>
    %41 = arith.addf %40, %39 : vector<1x2xf32>
    %42 = arith.divf %40, %41 : vector<1x2xf32>
    %43 = vector.extract_strided_slice %20 {offsets = [2, 0], sizes = [1, 2], strides = [1, 1]} : vector<3x2xf32> to vector<1x2xf32>
    %44 = vector.broadcast %15 : vector<1x1xf32> to vector<1x2xf32>
    %45 = arith.mulf %19, %44 : vector<1x2xf32>
    %46 = vector.broadcast %18 : vector<1x1xf32> to vector<1x2xf32>
    %47 = arith.addf %45, %46 : vector<1x2xf32>
    %48 = arith.mulf %31, %47 : vector<1x2xf32>
    %49 = arith.addf %43, %48 : vector<1x2xf32>
    %50 = math.tanh %49 : vector<1x2xf32>
    %cst_20 = arith.constant 1.000000e+00 : f32
    %51 = vector.broadcast %cst_20 : f32 to vector<1x2xf32>
    %52 = arith.subf %51, %42 : vector<1x2xf32>
    %53 = arith.mulf %52, %50 : vector<1x2xf32>
    %54 = arith.mulf %42, %19 : vector<1x2xf32>
    %55 = arith.addf %53, %54 : vector<1x2xf32>
    %56 = vector.extract_strided_slice %5 {offsets = [0, 2], sizes = [3, 2], strides = [1, 1]} : vector<3x16xf32> to vector<3x2xf32>
    %57 = vector.extract_strided_slice %56 {offsets = [0, 0], sizes = [1, 2], strides = [1, 1]} : vector<3x2xf32> to vector<1x2xf32>
    %58 = vector.broadcast %13 : vector<1x1xf32> to vector<1x2xf32>
    %59 = arith.mulf %55, %58 : vector<1x2xf32>
    %60 = arith.addf %57, %59 : vector<1x2xf32>
    %61 = vector.broadcast %16 : vector<1x1xf32> to vector<1x2xf32>
    %62 = arith.addf %60, %61 : vector<1x2xf32>
    %63 = arith.negf %62 : vector<1x2xf32>
    %64 = math.exp %63 : vector<1x2xf32>
    %cst_21 = arith.constant 1.000000e+00 : f32
    %65 = vector.broadcast %cst_21 : f32 to vector<1x2xf32>
    %66 = arith.addf %65, %64 : vector<1x2xf32>
    %67 = arith.divf %65, %66 : vector<1x2xf32>
    %68 = vector.extract_strided_slice %56 {offsets = [1, 0], sizes = [1, 2], strides = [1, 1]} : vector<3x2xf32> to vector<1x2xf32>
    %69 = vector.broadcast %14 : vector<1x1xf32> to vector<1x2xf32>
    %70 = arith.mulf %55, %69 : vector<1x2xf32>
    %71 = arith.addf %68, %70 : vector<1x2xf32>
    %72 = vector.broadcast %17 : vector<1x1xf32> to vector<1x2xf32>
    %73 = arith.addf %71, %72 : vector<1x2xf32>
    %74 = arith.negf %73 : vector<1x2xf32>
    %75 = math.exp %74 : vector<1x2xf32>
    %cst_22 = arith.constant 1.000000e+00 : f32
    %76 = vector.broadcast %cst_22 : f32 to vector<1x2xf32>
    %77 = arith.addf %76, %75 : vector<1x2xf32>
    %78 = arith.divf %76, %77 : vector<1x2xf32>
    %79 = vector.extract_strided_slice %56 {offsets = [2, 0], sizes = [1, 2], strides = [1, 1]} : vector<3x2xf32> to vector<1x2xf32>
    %80 = vector.broadcast %15 : vector<1x1xf32> to vector<1x2xf32>
    %81 = arith.mulf %55, %80 : vector<1x2xf32>
    %82 = vector.broadcast %18 : vector<1x1xf32> to vector<1x2xf32>
    %83 = arith.addf %81, %82 : vector<1x2xf32>
    %84 = arith.mulf %67, %83 : vector<1x2xf32>
    %85 = arith.addf %79, %84 : vector<1x2xf32>
    %86 = math.tanh %85 : vector<1x2xf32>
    %cst_23 = arith.constant 1.000000e+00 : f32
    %87 = vector.broadcast %cst_23 : f32 to vector<1x2xf32>
    %88 = arith.subf %87, %78 : vector<1x2xf32>
    %89 = arith.mulf %88, %86 : vector<1x2xf32>
    %90 = arith.mulf %78, %55 : vector<1x2xf32>
    %91 = arith.addf %89, %90 : vector<1x2xf32>
    %92 = vector.extract_strided_slice %5 {offsets = [0, 4], sizes = [3, 2], strides = [1, 1]} : vector<3x16xf32> to vector<3x2xf32>
    %93 = vector.extract_strided_slice %92 {offsets = [0, 0], sizes = [1, 2], strides = [1, 1]} : vector<3x2xf32> to vector<1x2xf32>
    %94 = vector.broadcast %13 : vector<1x1xf32> to vector<1x2xf32>
    %95 = arith.mulf %91, %94 : vector<1x2xf32>
    %96 = arith.addf %93, %95 : vector<1x2xf32>
    %97 = vector.broadcast %16 : vector<1x1xf32> to vector<1x2xf32>
    %98 = arith.addf %96, %97 : vector<1x2xf32>
    %99 = arith.negf %98 : vector<1x2xf32>
    %100 = math.exp %99 : vector<1x2xf32>
    %cst_24 = arith.constant 1.000000e+00 : f32
    %101 = vector.broadcast %cst_24 : f32 to vector<1x2xf32>
    %102 = arith.addf %101, %100 : vector<1x2xf32>
    %103 = arith.divf %101, %102 : vector<1x2xf32>
    %104 = vector.extract_strided_slice %92 {offsets = [1, 0], sizes = [1, 2], strides = [1, 1]} : vector<3x2xf32> to vector<1x2xf32>
    %105 = vector.broadcast %14 : vector<1x1xf32> to vector<1x2xf32>
    %106 = arith.mulf %91, %105 : vector<1x2xf32>
    %107 = arith.addf %104, %106 : vector<1x2xf32>
    %108 = vector.broadcast %17 : vector<1x1xf32> to vector<1x2xf32>
    %109 = arith.addf %107, %108 : vector<1x2xf32>
    %110 = arith.negf %109 : vector<1x2xf32>
    %111 = math.exp %110 : vector<1x2xf32>
    %cst_25 = arith.constant 1.000000e+00 : f32
    %112 = vector.broadcast %cst_25 : f32 to vector<1x2xf32>
    %113 = arith.addf %112, %111 : vector<1x2xf32>
    %114 = arith.divf %112, %113 : vector<1x2xf32>
    %115 = vector.extract_strided_slice %92 {offsets = [2, 0], sizes = [1, 2], strides = [1, 1]} : vector<3x2xf32> to vector<1x2xf32>
    %116 = vector.broadcast %15 : vector<1x1xf32> to vector<1x2xf32>
    %117 = arith.mulf %91, %116 : vector<1x2xf32>
    %118 = vector.broadcast %18 : vector<1x1xf32> to vector<1x2xf32>
    %119 = arith.addf %117, %118 : vector<1x2xf32>
    %120 = arith.mulf %103, %119 : vector<1x2xf32>
    %121 = arith.addf %115, %120 : vector<1x2xf32>
    %122 = math.tanh %121 : vector<1x2xf32>
    %cst_26 = arith.constant 1.000000e+00 : f32
    %123 = vector.broadcast %cst_26 : f32 to vector<1x2xf32>
    %124 = arith.subf %123, %114 : vector<1x2xf32>
    %125 = arith.mulf %124, %122 : vector<1x2xf32>
    %126 = arith.mulf %114, %91 : vector<1x2xf32>
    %127 = arith.addf %125, %126 : vector<1x2xf32>
    %128 = vector.extract_strided_slice %5 {offsets = [0, 6], sizes = [3, 2], strides = [1, 1]} : vector<3x16xf32> to vector<3x2xf32>
    %129 = vector.extract_strided_slice %128 {offsets = [0, 0], sizes = [1, 2], strides = [1, 1]} : vector<3x2xf32> to vector<1x2xf32>
    %130 = vector.broadcast %13 : vector<1x1xf32> to vector<1x2xf32>
    %131 = arith.mulf %127, %130 : vector<1x2xf32>
    %132 = arith.addf %129, %131 : vector<1x2xf32>
    %133 = vector.broadcast %16 : vector<1x1xf32> to vector<1x2xf32>
    %134 = arith.addf %132, %133 : vector<1x2xf32>
    %135 = arith.negf %134 : vector<1x2xf32>
    %136 = math.exp %135 : vector<1x2xf32>
    %cst_27 = arith.constant 1.000000e+00 : f32
    %137 = vector.broadcast %cst_27 : f32 to vector<1x2xf32>
    %138 = arith.addf %137, %136 : vector<1x2xf32>
    %139 = arith.divf %137, %138 : vector<1x2xf32>
    %140 = vector.extract_strided_slice %128 {offsets = [1, 0], sizes = [1, 2], strides = [1, 1]} : vector<3x2xf32> to vector<1x2xf32>
    %141 = vector.broadcast %14 : vector<1x1xf32> to vector<1x2xf32>
    %142 = arith.mulf %127, %141 : vector<1x2xf32>
    %143 = arith.addf %140, %142 : vector<1x2xf32>
    %144 = vector.broadcast %17 : vector<1x1xf32> to vector<1x2xf32>
    %145 = arith.addf %143, %144 : vector<1x2xf32>
    %146 = arith.negf %145 : vector<1x2xf32>
    %147 = math.exp %146 : vector<1x2xf32>
    %cst_28 = arith.constant 1.000000e+00 : f32
    %148 = vector.broadcast %cst_28 : f32 to vector<1x2xf32>
    %149 = arith.addf %148, %147 : vector<1x2xf32>
    %150 = arith.divf %148, %149 : vector<1x2xf32>
    %151 = vector.extract_strided_slice %128 {offsets = [2, 0], sizes = [1, 2], strides = [1, 1]} : vector<3x2xf32> to vector<1x2xf32>
    %152 = vector.broadcast %15 : vector<1x1xf32> to vector<1x2xf32>
    %153 = arith.mulf %127, %152 : vector<1x2xf32>
    %154 = vector.broadcast %18 : vector<1x1xf32> to vector<1x2xf32>
    %155 = arith.addf %153, %154 : vector<1x2xf32>
    %156 = arith.mulf %139, %155 : vector<1x2xf32>
    %157 = arith.addf %151, %156 : vector<1x2xf32>
    %158 = math.tanh %157 : vector<1x2xf32>
    %cst_29 = arith.constant 1.000000e+00 : f32
    %159 = vector.broadcast %cst_29 : f32 to vector<1x2xf32>
    %160 = arith.subf %159, %150 : vector<1x2xf32>
    %161 = arith.mulf %160, %158 : vector<1x2xf32>
    %162 = arith.mulf %150, %127 : vector<1x2xf32>
    %163 = arith.addf %161, %162 : vector<1x2xf32>
    %164 = vector.extract_strided_slice %5 {offsets = [0, 8], sizes = [3, 2], strides = [1, 1]} : vector<3x16xf32> to vector<3x2xf32>
    %165 = vector.extract_strided_slice %164 {offsets = [0, 0], sizes = [1, 2], strides = [1, 1]} : vector<3x2xf32> to vector<1x2xf32>
    %166 = vector.broadcast %13 : vector<1x1xf32> to vector<1x2xf32>
    %167 = arith.mulf %163, %166 : vector<1x2xf32>
    %168 = arith.addf %165, %167 : vector<1x2xf32>
    %169 = vector.broadcast %16 : vector<1x1xf32> to vector<1x2xf32>
    %170 = arith.addf %168, %169 : vector<1x2xf32>
    %171 = arith.negf %170 : vector<1x2xf32>
    %172 = math.exp %171 : vector<1x2xf32>
    %cst_30 = arith.constant 1.000000e+00 : f32
    %173 = vector.broadcast %cst_30 : f32 to vector<1x2xf32>
    %174 = arith.addf %173, %172 : vector<1x2xf32>
    %175 = arith.divf %173, %174 : vector<1x2xf32>
    %176 = vector.extract_strided_slice %164 {offsets = [1, 0], sizes = [1, 2], strides = [1, 1]} : vector<3x2xf32> to vector<1x2xf32>
    %177 = vector.broadcast %14 : vector<1x1xf32> to vector<1x2xf32>
    %178 = arith.mulf %163, %177 : vector<1x2xf32>
    %179 = arith.addf %176, %178 : vector<1x2xf32>
    %180 = vector.broadcast %17 : vector<1x1xf32> to vector<1x2xf32>
    %181 = arith.addf %179, %180 : vector<1x2xf32>
    %182 = arith.negf %181 : vector<1x2xf32>
    %183 = math.exp %182 : vector<1x2xf32>
    %cst_31 = arith.constant 1.000000e+00 : f32
    %184 = vector.broadcast %cst_31 : f32 to vector<1x2xf32>
    %185 = arith.addf %184, %183 : vector<1x2xf32>
    %186 = arith.divf %184, %185 : vector<1x2xf32>
    %187 = vector.extract_strided_slice %164 {offsets = [2, 0], sizes = [1, 2], strides = [1, 1]} : vector<3x2xf32> to vector<1x2xf32>
    %188 = vector.broadcast %15 : vector<1x1xf32> to vector<1x2xf32>
    %189 = arith.mulf %163, %188 : vector<1x2xf32>
    %190 = vector.broadcast %18 : vector<1x1xf32> to vector<1x2xf32>
    %191 = arith.addf %189, %190 : vector<1x2xf32>
    %192 = arith.mulf %175, %191 : vector<1x2xf32>
    %193 = arith.addf %187, %192 : vector<1x2xf32>
    %194 = math.tanh %193 : vector<1x2xf32>
    %cst_32 = arith.constant 1.000000e+00 : f32
    %195 = vector.broadcast %cst_32 : f32 to vector<1x2xf32>
    %196 = arith.subf %195, %186 : vector<1x2xf32>
    %197 = arith.mulf %196, %194 : vector<1x2xf32>
    %198 = arith.mulf %186, %163 : vector<1x2xf32>
    %199 = arith.addf %197, %198 : vector<1x2xf32>
    %200 = vector.extract_strided_slice %5 {offsets = [0, 10], sizes = [3, 2], strides = [1, 1]} : vector<3x16xf32> to vector<3x2xf32>
    %201 = vector.extract_strided_slice %200 {offsets = [0, 0], sizes = [1, 2], strides = [1, 1]} : vector<3x2xf32> to vector<1x2xf32>
    %202 = vector.broadcast %13 : vector<1x1xf32> to vector<1x2xf32>
    %203 = arith.mulf %199, %202 : vector<1x2xf32>
    %204 = arith.addf %201, %203 : vector<1x2xf32>
    %205 = vector.broadcast %16 : vector<1x1xf32> to vector<1x2xf32>
    %206 = arith.addf %204, %205 : vector<1x2xf32>
    %207 = arith.negf %206 : vector<1x2xf32>
    %208 = math.exp %207 : vector<1x2xf32>
    %cst_33 = arith.constant 1.000000e+00 : f32
    %209 = vector.broadcast %cst_33 : f32 to vector<1x2xf32>
    %210 = arith.addf %209, %208 : vector<1x2xf32>
    %211 = arith.divf %209, %210 : vector<1x2xf32>
    %212 = vector.extract_strided_slice %200 {offsets = [1, 0], sizes = [1, 2], strides = [1, 1]} : vector<3x2xf32> to vector<1x2xf32>
    %213 = vector.broadcast %14 : vector<1x1xf32> to vector<1x2xf32>
    %214 = arith.mulf %199, %213 : vector<1x2xf32>
    %215 = arith.addf %212, %214 : vector<1x2xf32>
    %216 = vector.broadcast %17 : vector<1x1xf32> to vector<1x2xf32>
    %217 = arith.addf %215, %216 : vector<1x2xf32>
    %218 = arith.negf %217 : vector<1x2xf32>
    %219 = math.exp %218 : vector<1x2xf32>
    %cst_34 = arith.constant 1.000000e+00 : f32
    %220 = vector.broadcast %cst_34 : f32 to vector<1x2xf32>
    %221 = arith.addf %220, %219 : vector<1x2xf32>
    %222 = arith.divf %220, %221 : vector<1x2xf32>
    %223 = vector.extract_strided_slice %200 {offsets = [2, 0], sizes = [1, 2], strides = [1, 1]} : vector<3x2xf32> to vector<1x2xf32>
    %224 = vector.broadcast %15 : vector<1x1xf32> to vector<1x2xf32>
    %225 = arith.mulf %199, %224 : vector<1x2xf32>
    %226 = vector.broadcast %18 : vector<1x1xf32> to vector<1x2xf32>
    %227 = arith.addf %225, %226 : vector<1x2xf32>
    %228 = arith.mulf %211, %227 : vector<1x2xf32>
    %229 = arith.addf %223, %228 : vector<1x2xf32>
    %230 = math.tanh %229 : vector<1x2xf32>
    %cst_35 = arith.constant 1.000000e+00 : f32
    %231 = vector.broadcast %cst_35 : f32 to vector<1x2xf32>
    %232 = arith.subf %231, %222 : vector<1x2xf32>
    %233 = arith.mulf %232, %230 : vector<1x2xf32>
    %234 = arith.mulf %222, %199 : vector<1x2xf32>
    %235 = arith.addf %233, %234 : vector<1x2xf32>
    %236 = vector.extract_strided_slice %5 {offsets = [0, 12], sizes = [3, 2], strides = [1, 1]} : vector<3x16xf32> to vector<3x2xf32>
    %237 = vector.extract_strided_slice %236 {offsets = [0, 0], sizes = [1, 2], strides = [1, 1]} : vector<3x2xf32> to vector<1x2xf32>
    %238 = vector.broadcast %13 : vector<1x1xf32> to vector<1x2xf32>
    %239 = arith.mulf %235, %238 : vector<1x2xf32>
    %240 = arith.addf %237, %239 : vector<1x2xf32>
    %241 = vector.broadcast %16 : vector<1x1xf32> to vector<1x2xf32>
    %242 = arith.addf %240, %241 : vector<1x2xf32>
    %243 = arith.negf %242 : vector<1x2xf32>
    %244 = math.exp %243 : vector<1x2xf32>
    %cst_36 = arith.constant 1.000000e+00 : f32
    %245 = vector.broadcast %cst_36 : f32 to vector<1x2xf32>
    %246 = arith.addf %245, %244 : vector<1x2xf32>
    %247 = arith.divf %245, %246 : vector<1x2xf32>
    %248 = vector.extract_strided_slice %236 {offsets = [1, 0], sizes = [1, 2], strides = [1, 1]} : vector<3x2xf32> to vector<1x2xf32>
    %249 = vector.broadcast %14 : vector<1x1xf32> to vector<1x2xf32>
    %250 = arith.mulf %235, %249 : vector<1x2xf32>
    %251 = arith.addf %248, %250 : vector<1x2xf32>
    %252 = vector.broadcast %17 : vector<1x1xf32> to vector<1x2xf32>
    %253 = arith.addf %251, %252 : vector<1x2xf32>
    %254 = arith.negf %253 : vector<1x2xf32>
    %255 = math.exp %254 : vector<1x2xf32>
    %cst_37 = arith.constant 1.000000e+00 : f32
    %256 = vector.broadcast %cst_37 : f32 to vector<1x2xf32>
    %257 = arith.addf %256, %255 : vector<1x2xf32>
    %258 = arith.divf %256, %257 : vector<1x2xf32>
    %259 = vector.extract_strided_slice %236 {offsets = [2, 0], sizes = [1, 2], strides = [1, 1]} : vector<3x2xf32> to vector<1x2xf32>
    %260 = vector.broadcast %15 : vector<1x1xf32> to vector<1x2xf32>
    %261 = arith.mulf %235, %260 : vector<1x2xf32>
    %262 = vector.broadcast %18 : vector<1x1xf32> to vector<1x2xf32>
    %263 = arith.addf %261, %262 : vector<1x2xf32>
    %264 = arith.mulf %247, %263 : vector<1x2xf32>
    %265 = arith.addf %259, %264 : vector<1x2xf32>
    %266 = math.tanh %265 : vector<1x2xf32>
    %cst_38 = arith.constant 1.000000e+00 : f32
    %267 = vector.broadcast %cst_38 : f32 to vector<1x2xf32>
    %268 = arith.subf %267, %258 : vector<1x2xf32>
    %269 = arith.mulf %268, %266 : vector<1x2xf32>
    %270 = arith.mulf %258, %235 : vector<1x2xf32>
    %271 = arith.addf %269, %270 : vector<1x2xf32>
    %272 = vector.extract_strided_slice %5 {offsets = [0, 14], sizes = [3, 2], strides = [1, 1]} : vector<3x16xf32> to vector<3x2xf32>
    %273 = vector.extract_strided_slice %272 {offsets = [0, 0], sizes = [1, 2], strides = [1, 1]} : vector<3x2xf32> to vector<1x2xf32>
    %274 = vector.broadcast %13 : vector<1x1xf32> to vector<1x2xf32>
    %275 = arith.mulf %271, %274 : vector<1x2xf32>
    %276 = arith.addf %273, %275 : vector<1x2xf32>
    %277 = vector.broadcast %16 : vector<1x1xf32> to vector<1x2xf32>
    %278 = arith.addf %276, %277 : vector<1x2xf32>
    %279 = arith.negf %278 : vector<1x2xf32>
    %280 = math.exp %279 : vector<1x2xf32>
    %cst_39 = arith.constant 1.000000e+00 : f32
    %281 = vector.broadcast %cst_39 : f32 to vector<1x2xf32>
    %282 = arith.addf %281, %280 : vector<1x2xf32>
    %283 = arith.divf %281, %282 : vector<1x2xf32>
    %284 = vector.extract_strided_slice %272 {offsets = [1, 0], sizes = [1, 2], strides = [1, 1]} : vector<3x2xf32> to vector<1x2xf32>
    %285 = vector.broadcast %14 : vector<1x1xf32> to vector<1x2xf32>
    %286 = arith.mulf %271, %285 : vector<1x2xf32>
    %287 = arith.addf %284, %286 : vector<1x2xf32>
    %288 = vector.broadcast %17 : vector<1x1xf32> to vector<1x2xf32>
    %289 = arith.addf %287, %288 : vector<1x2xf32>
    %290 = arith.negf %289 : vector<1x2xf32>
    %291 = math.exp %290 : vector<1x2xf32>
    %cst_40 = arith.constant 1.000000e+00 : f32
    %292 = vector.broadcast %cst_40 : f32 to vector<1x2xf32>
    %293 = arith.addf %292, %291 : vector<1x2xf32>
    %294 = arith.divf %292, %293 : vector<1x2xf32>
    %295 = vector.extract_strided_slice %272 {offsets = [2, 0], sizes = [1, 2], strides = [1, 1]} : vector<3x2xf32> to vector<1x2xf32>
    %296 = vector.broadcast %15 : vector<1x1xf32> to vector<1x2xf32>
    %297 = arith.mulf %271, %296 : vector<1x2xf32>
    %298 = vector.broadcast %18 : vector<1x1xf32> to vector<1x2xf32>
    %299 = arith.addf %297, %298 : vector<1x2xf32>
    %300 = arith.mulf %283, %299 : vector<1x2xf32>
    %301 = arith.addf %295, %300 : vector<1x2xf32>
    %302 = math.tanh %301 : vector<1x2xf32>
    %cst_41 = arith.constant 1.000000e+00 : f32
    %303 = vector.broadcast %cst_41 : f32 to vector<1x2xf32>
    %304 = arith.subf %303, %294 : vector<1x2xf32>
    %305 = arith.mulf %304, %302 : vector<1x2xf32>
    %306 = arith.mulf %294, %271 : vector<1x2xf32>
    %307 = arith.addf %305, %306 : vector<1x2xf32>
    %308 = tpu.concatenate %55, %91, %127, %163, %199, %235, %271, %307 in 0 : vector<1x2xf32>, vector<1x2xf32>, vector<1x2xf32>, vector<1x2xf32>, vector<1x2xf32>, vector<1x2xf32>, vector<1x2xf32>, vector<1x2xf32> -> vector<8x2xf32>
    %c0_42 = arith.constant 0 : index
    %c0_43 = arith.constant 0 : index
    %309 = vector.load %arg7[%c0_42, %c0_43] : memref<1x1xf32, #tpu.memory_space<vmem>>, vector<1x1xf32>
    %310 = vector.broadcast %309 : vector<1x1xf32> to vector<8x2xf32>
    %311 = arith.mulf %308, %310 : vector<8x2xf32>
    %312 = arith.addf %311, %10 : vector<8x2xf32>
    %c0_44 = arith.constant 0 : index
    %c0_45 = arith.constant 0 : index
    %313 = vector.load %arg8[%c0_44, %c0_45] : memref<1x1xf32, #tpu.memory_space<vmem>>, vector<1x1xf32>
    %314 = vector.broadcast %313 : vector<1x1xf32> to vector<8x2xf32>
    %315 = arith.addf %312, %314 : vector<8x2xf32>
    %c0_46 = arith.constant 0 : index
    %c0_47 = arith.constant 0 : index
    %316 = vector.load %arg10[%c0_46, %c0_47] : memref<8x2xf32, #tpu.memory_space<vmem>>, vector<8x2xf32>
    tpu.vector_store %arg10[%c0_46, %c0_47], %315 {strides = array<i32>} : memref<8x2xf32, #tpu.memory_space<vmem>>, vector<8x2xf32>,
    return
  }
}

</mosaic_0001>

<llo_original>
// kernel: tpu_custom_call.1
$region0: #{tpu_custom_call.1}
  #allocation0 [shape = 'u32[]', space=smem, size = 0x4, offset = 0x4, fixed_abs, tag = 'smem constant byte address 0x4 - core index']
  #allocation1 [shape = 'u32[144,128]{1,0:T(1,128)}', space=vmem, size = 0x12000, scoped, tag = 'internal scratch']
  #allocation2 [shape = 'f32[1,1]{1,0:T(1,128)S(1)}', space=vmem, size = 0x200, scoped, tag = 'scoped memory for tpu_custom_call.1']
  #allocation3 [shape = 'f32[1,1]{1,0:T(1,128)S(1)}', space=vmem, size = 0x200, scoped, tag = 'scoped memory for tpu_custom_call.1']
  %s0 = inlined_call_operand.vmem [shape: f32[5,16], index: 0, kind: input, shape index: {}]
  %s1 = inlined_call_operand.vmem [shape: f32[6,8,2], index: 1, kind: input, shape index: {}]
  %s2 = inlined_call_operand.vmem [shape: f32[3,5], index: 2, kind: input, shape index: {}]
  %s3 = inlined_call_operand.vmem [shape: f32[3,1], index: 3, kind: input, shape index: {}]
  %s4 = inlined_call_operand.vmem [shape: f32[3,1], index: 4, kind: input, shape index: {}]
  %s5 = inlined_call_operand.vmem [shape: f32[3,1], index: 5, kind: input, shape index: {}]
  %s6 = inlined_call_operand.vmem [shape: f32[6,1,1], index: 6, kind: input, shape index: {}]
  %s7 = inlined_call_operand.<no memory space> [shape: f32[1,1], index: 7, kind: input, shape index: {}]
  %s8 = inlined_call_operand.<no memory space> [shape: f32[1,1], index: 8, kind: input, shape index: {}]
  %s9 = inlined_call_operand.vmem [shape: f32[1,2], index: 9, kind: input, shape index: {}]
  %s10 = inlined_call_operand.vmem [shape: f32[8,2], index: 10, kind: output, shape index: {}]
  %s11 = sld [smem:[#allocation0]]
  $region50: #{tpu_custom_call.1} parent=0
    _
  %s13 = ssub.s32 1, %s11
  %s14 = scalar_select 0, %s13, %s11
  %v15 = vstv %s7
  %16 = vst [vmem:[#allocation2] sm:$0x1] %v15
  %v17 = vstv %s8
  %18 = vst [vmem:[#allocation3] sm:$0x1] %v17
  // Predicated region
  $region2: #{tpu_custom_call.1} parent=0 // pred_check
    _
  $region3: #{tpu_custom_call.1} parent=0 // pred_check_branch
    %20 = sbr.rel (0) target = $region5
  $region4: #{tpu_custom_call.1} parent=0 // pred_region
    _
  $region5: #{tpu_custom_call.1} parent=0 // pred_fallthru
    _
  // Predicated region
  $region6: #{tpu_custom_call.1} parent=0 // pred_check
    _
  $region7: #{tpu_custom_call.1} parent=0 // pred_check_branch
    %22 = sbr.rel (0) target = $region9
  $region8: #{tpu_custom_call.1} parent=0 // pred_region
    _
  $region9: #{tpu_custom_call.1} parent=0 // pred_fallthru
    _
  // Predicated region
  $region10: #{tpu_custom_call.1} parent=0 // pred_check
    _
  $region11: #{tpu_custom_call.1} parent=0 // pred_check_branch
    %24 = sbr.rel (0) target = $region13
  $region12: #{tpu_custom_call.1} parent=0 // pred_region
    _
  $region13: #{tpu_custom_call.1} parent=0 // pred_fallthru
    _
  // Predicated region
  $region14: #{tpu_custom_call.1} parent=0 // pred_check
    _
  $region15: #{tpu_custom_call.1} parent=0 // pred_check_branch
    %26 = sbr.rel (0) target = $region17
  $region16: #{tpu_custom_call.1} parent=0 // pred_region
    _
  $region17: #{tpu_custom_call.1} parent=0 // pred_fallthru
    _
  // Predicated region
  $region18: #{tpu_custom_call.1} parent=0 // pred_check
    _
  $region19: #{tpu_custom_call.1} parent=0 // pred_check_branch
    %28 = sbr.rel (0) target = $region21
  $region20: #{tpu_custom_call.1} parent=0 // pred_region
    _
  $region21: #{tpu_custom_call.1} parent=0 // pred_fallthru
    _
  // Predicated region
  $region22: #{tpu_custom_call.1} parent=0 // pred_check
    _
  $region23: #{tpu_custom_call.1} parent=0 // pred_check_branch
    %30 = sbr.rel (0) target = $region25
  $region24: #{tpu_custom_call.1} parent=0 // pred_region
    _
  $region25: #{tpu_custom_call.1} parent=0 // pred_fallthru
    _
  // Predicated region
  $region26: #{tpu_custom_call.1} parent=0 // pred_check
    _
  $region27: #{tpu_custom_call.1} parent=0 // pred_check_branch
    %32 = sbr.rel (0) target = $region29
  $region28: #{tpu_custom_call.1} parent=0 // pred_region
    _
  $region29: #{tpu_custom_call.1} parent=0 // pred_fallthru
    _
  // Predicated region
  $region30: #{tpu_custom_call.1} parent=0 // pred_check
    _
  $region31: #{tpu_custom_call.1} parent=0 // pred_check_branch
    %34 = sbr.rel (0) target = $region33
  $region32: #{tpu_custom_call.1} parent=0 // pred_region
    _
  $region33: #{tpu_custom_call.1} parent=0 // pred_fallthru
    _
  // Predicated region
  $region34: #{tpu_custom_call.1} parent=0 // pred_check
    _
  $region35: #{tpu_custom_call.1} parent=0 // pred_check_branch
    %36 = sbr.rel (0) target = $region37
  $region36: #{tpu_custom_call.1} parent=0 // pred_region
    _
  $region37: #{tpu_custom_call.1} parent=0 // pred_fallthru
    _
  // Predicated region
  $region38: #{tpu_custom_call.1} parent=0 // pred_check
    _
  $region39: #{tpu_custom_call.1} parent=0 // pred_check_branch
    %38 = sbr.rel (0) target = $region41
  $region40: #{tpu_custom_call.1} parent=0 // pred_region
    _
  $region41: #{tpu_custom_call.1} parent=0 // pred_fallthru
    _
  %v39 = vld [vmem:[%s2] sm:$0x7]
  %v40 = vld [vmem:[%s0] sm:$0x1f]
  %v41 = vld [vmem:[%s4] sm:$0x7]
  %43 = vset.pattern.permute.xlu0 0
  %44 = vperm.xlu0 %43, %v41
  %v45 = vpop.permute.xlu0 %44
  %vm47 = vcmask 39936
  %v49 = vsel %vm47, %v39, 0
  %vm51 = vcmask 1044480
  %v53 = vsel %vm51, %v40, 0
  %55 = vmatprep.subr.mxu0 0.0
  %56 = vmatpush1.msra.mxu0 0.0
  %57 = vmatprep.subr.mxu0 0.0
  %58 = vmatpush1.msra.mxu0 0.0
  %59 = vmatprep.subr.mxu0 0.0
  %60 = vmatpush1.msra.mxu0 0.0
  %61 = vmatprep.subr.mxu0 0.0
  %62 = vmatpush1.msra.mxu0 0.0
  %63 = vmatprep.subr.mxu0 0.0
  %64 = vmatpush1.msra.mxu0 0.0
  %65 = vmatprep.subr.mxu0 0.0
  %66 = vmatpush1.msra.mxu0 0.0
  %67 = vmatprep.subr.mxu0 0.0
  %68 = vmatpush1.msra.mxu0 0.0
  %69 = vmatprep.subr.mxu0 0.0
  %70 = vmatpush1.msra.mxu0 0.0
  %71 = vmatprep.subr.mxu0 0.0
  %72 = vmatpush1.msra.mxu0 0.0
  %73 = vmatprep.subr.mxu0 0.0
  %74 = vmatpush1.msra.mxu0 0.0
  %75 = vmatprep.subr.mxu0 0.0
  %76 = vmatpush1.msra.mxu0 0.0
  %77 = vmatprep.subr.mxu0 0.0
  %78 = vmatpush1.msra.mxu0 0.0
  %79 = vmatprep.subr.mxu0 0.0
  %80 = vmatpush1.msra.mxu0 0.0
  %81 = vmatprep.subr.mxu0 0.0
  %82 = vmatpush1.msra.mxu0 0.0
  %83 = vmatprep.subr.mxu0 0.0
  %84 = vmatpush1.msra.mxu0 0.0
  %85 = vmatprep.subr.mxu0 0.0
  %86 = vmatpush1.msra.mxu0 %v53
  %87 = vmatprep.subr.mxu0 0.0
  %88 = vmatpush2.msra.mxu0 0.0
  %89 = vmatprep.subr.mxu0 0.0
  %90 = vmatpush2.msra.mxu0 0.0
  %91 = vmatprep.subr.mxu0 0.0
  %92 = vmatpush2.msra.mxu0 0.0
  %93 = vmatprep.subr.mxu0 0.0
  %94 = vmatpush2.msra.mxu0 0.0
  %95 = vmatprep.subr.mxu0 0.0
  %96 = vmatpush2.msra.mxu0 0.0
  %97 = vmatprep.subr.mxu0 0.0
  %98 = vmatpush2.msra.mxu0 0.0
  %99 = vmatprep.subr.mxu0 0.0
  %100 = vmatpush2.msra.mxu0 0.0
  %101 = vmatprep.subr.mxu0 0.0
  %102 = vmatpush2.msra.mxu0 0.0
  %103 = vmatprep.subr.mxu0 0.0
  %104 = vmatpush2.msra.mxu0 0.0
  %105 = vmatprep.subr.mxu0 0.0
  %106 = vmatpush2.msra.mxu0 0.0
  %107 = vmatprep.subr.mxu0 0.0
  %108 = vmatpush2.msra.mxu0 0.0
  %109 = vmatprep.subr.mxu0 0.0
  %110 = vmatpush2.msra.mxu0 0.0
  %111 = vmatprep.subr.mxu0 0.0
  %112 = vmatpush2.msra.mxu0 0.0
  %113 = vmatprep.subr.mxu0 0.0
  %114 = vmatpush2.msra.mxu0 0.0
  %115 = vmatprep.subr.mxu0 0.0
  %116 = vmatpush2.msra.mxu0 0.0
  %117 = vmatprep.subr.mxu0 0.0
  %118 = vmatpush2.msra.mxu0 0.0
  %119 = vmatprep.mubr.f32.mxu0 0.0
  %120 = vmatmul.mubr.f32.gmra.mxu0 %v49
  %v121 = vpop.f32.mrf.mxu0
  %v122 = vadd.f32 %v45, %v121
  %v123 = vpop.f32.mrf.mxu0
  %124 = vdwg.mxu0
  %v125 = vld [vmem:[%s6] sm:$0x1]
  %v126 = vld [vmem:[%s6 + $0x1] sm:$0x1]
  %v127 = vld [vmem:[%s6 + $0x2] sm:$0x1]
  %v128 = vld [vmem:[%s6 + $0x3] sm:$0x1]
  %v129 = vld [vmem:[%s6 + $0x4] sm:$0x1]
  %v130 = vld [vmem:[%s6 + $0x5] sm:$0x1]
  %v131 = vld [vmem:[%s1] sm:$0xff]
  %v132 = vld [vmem:[%s1 + $0x8] sm:$0xff]
  %v133 = vld [vmem:[%s1 + $0x10] sm:$0xff]
  %v134 = vld [vmem:[%s1 + $0x18] sm:$0xff]
  %v135 = vld [vmem:[%s1 + $0x20] sm:$0xff]
  %v136 = vld [vmem:[%s1 + $0x28] sm:$0xff]
  %v143 = vlaneseq
  %v144 = vshrl.u32 %v143, 7
  %v145 = vsub.s32 0, %v144
  %v146 = vrot.slane %v125, %v145
  %v147 = vlaneseq
  %v148 = vshrl.u32 %v147, 7
  %v149 = vsub.s32 0, %v148
  %v150 = vrot.slane %v126, %v149
  %v151 = vlaneseq
  %v152 = vshrl.u32 %v151, 7
  %v153 = vsub.s32 0, %v152
  %v154 = vrot.slane %v127, %v153
  %v155 = vlaneseq
  %v156 = vshrl.u32 %v155, 7
  %v157 = vsub.s32 0, %v156
  %v158 = vrot.slane %v128, %v157
  %v159 = vlaneseq
  %v160 = vshrl.u32 %v159, 7
  %v161 = vsub.s32 0, %v160
  %v162 = vrot.slane %v129, %v161
  %v163 = vlaneseq
  %v164 = vshrl.u32 %v163, 7
  %v165 = vsub.s32 0, %v164
  %v166 = vrot.slane %v130, %v165
  %167 = vset.pattern.permute.xlu0 0
  %168 = vperm.xlu0 %167, %v146
  %v169 = vpop.permute.xlu0 %168
  %171 = vset.pattern.permute.xlu0 0
  %172 = vperm.xlu0 %171, %v150
  %v173 = vpop.permute.xlu0 %172
  %175 = vset.pattern.permute.xlu0 0
  %176 = vperm.xlu0 %175, %v154
  %v177 = vpop.permute.xlu0 %176
  %179 = vset.pattern.permute.xlu0 0
  %180 = vperm.xlu0 %179, %v158
  %v181 = vpop.permute.xlu0 %180
  %183 = vset.pattern.permute.xlu0 0
  %184 = vperm.xlu0 %183, %v162
  %v185 = vpop.permute.xlu0 %184
  %187 = vset.pattern.permute.xlu0 0
  %188 = vperm.xlu0 %187, %v166
  %v189 = vpop.permute.xlu0 %188
  %v191 = vmul.f32 %v169, %v131
  %v192 = vmul.f32 %v173, %v132
  %v193 = vmul.f32 %v177, %v133
  %v194 = vmul.f32 %v181, %v134
  %v195 = vmul.f32 %v185, %v135
  %v196 = vmul.f32 %v189, %v136
  %vm197 = vcmask 15360
  %v198 = vsel %vm197, %v191, 0.0
  %v199 = vsel %vm197, %v192, 0.0
  %v200 = vadd.f32 %v198, %v199
  %v201 = vsel %vm197, %v193, 0.0
  %v202 = vadd.f32 %v200, %v201
  %v203 = vsel %vm197, %v194, 0.0
  %v204 = vadd.f32 %v202, %v203
  %v205 = vsel %vm197, %v195, 0.0
  %v206 = vadd.f32 %v204, %v205
  %v207 = vsel %vm197, %v196, 0.0
  %v208 = vadd.f32 %v206, %v207
  %v209 = vld [vmem:[%s3] sm:$0x7]
  %v210 = vld [vmem:[%s5] sm:$0x7]
  %v211 = vld [vmem:[%s9] sm:$0x1]
  %213 = vset.pattern.permute.xlu0 0
  %214 = vperm.xlu0 %213, %v209
  %v215 = vpop.permute.xlu0 %214
  %v217 = vmul.f32 %v211, %v215
  %v218 = vadd.f32 %v122, %v217
  %220 = vset.pattern.permute.xlu0 0
  %221 = vperm.xlu0 %220, %v210
  %v222 = vpop.permute.xlu0 %221
  %v224 = vadd.f32 %v218, %v222
  %v225 = vxor.u32 %v224, 2147483648
  %v226 = vmul.f32 %v225, 1.442695
  %v227 = vpow.pop %v226
  %v228 = vadd.f32 %v227, 1.0
  %v229 = vrcp.pop %v228
  %v230 = vmul.f32 1.0, %v229
  %v231 = vlaneseq
  %v232 = vshrl.u32 %v231, 7
  %v233 = vsub.s32 1, %v232
  %v234 = vrot.slane %v215, %v233
  %v236 = vmul.f32 %v211, %v234
  %v238 = vlaneseq
  %v239 = vshrl.u32 %v238, 7
  %v240 = vsub.s32 0, %v239
  %v241 = vrot.slane %v236, %v240
  %v243 = vadd.f32 %v122, %v241
  %v244 = vadd.f32 %v243, %v222
  %v245 = vxor.u32 %v244, 2147483648
  %v246 = vmul.f32 %v245, 1.442695
  %v247 = vpow.pop %v246
  %v248 = vadd.f32 %v247, 1.0
  %v249 = vrcp.pop %v248
  %v250 = vmul.f32 1.0, %v249
  %v251 = vlaneseq
  %v252 = vshrl.u32 %v251, 7
  %v253 = vsub.s32 2, %v252
  %v254 = vrot.slane %v215, %v253
  %v256 = vmul.f32 %v211, %v254
  %v257 = vlaneseq
  %v258 = vshrl.u32 %v257, 7
  %v259 = vsub.s32 2, %v258
  %v260 = vrot.slane %v222, %v259
  %v262 = vadd.f32 %v256, %v260
  %v263 = vmul.f32 %v230, %v262
  %v265 = vrot.slane %v263, 6
  %v267 = vadd.f32 %v122, %v265
  %v268 = vtanh.pop %v267
  %v269 = vsub.f32 1.0, %v250
  %v271 = vrot.slane %v268, 1
  %v273 = vmul.f32 %v269, %v271
  %v275 = vlaneseq
  %v276 = vshrl.u32 %v275, 7
  %v277 = vsub.s32 0, %v276
  %v278 = vrot.slane %v211, %v277
  %v280 = vmul.f32 %v250, %v278
  %v281 = vadd.f32 %v273, %v280
  %v282 = vrot.slane %v215, 7
  %v284 = vmul.f32 %v281, %v282
  %v286 = vrot.slane %v284, 1
  %287 = vrot.lane.b32.xlu0 %v286, 2
  %v288 = vpop.permute.xlu0 %287
  %v290 = vadd.f32 %v122, %v288
  %v291 = vadd.f32 %v290, %v222
  %v292 = vxor.u32 %v291, 2147483648
  %v293 = vmul.f32 %v292, 1.442695
  %v294 = vpow.pop %v293
  %v295 = vadd.f32 %v294, 1.0
  %v296 = vrcp.pop %v295
  %v297 = vmul.f32 1.0, %v296
  %v298 = vmul.f32 %v281, %v215
  %300 = vrot.lane.b32.xlu0 %v298, 2
  %v301 = vpop.permute.xlu0 %300
  %v303 = vadd.f32 %v122, %v301
  %v304 = vadd.f32 %v303, %v222
  %v305 = vxor.u32 %v304, 2147483648
  %v306 = vmul.f32 %v305, 1.442695
  %v307 = vpow.pop %v306
  %v308 = vadd.f32 %v307, 1.0
  %v309 = vrcp.pop %v308
  %v310 = vmul.f32 1.0, %v309
  %v311 = vrot.slane %v215, 1
  %v313 = vmul.f32 %v281, %v311
  %v314 = vrot.slane %v222, 1
  %v316 = vadd.f32 %v313, %v314
  %v318 = vrot.slane %v316, 1
  %319 = vrot.lane.b32.xlu0 %v318, 2
  %v320 = vpop.permute.xlu0 %319
  %v322 = vmul.f32 %v297, %v320
  %v324 = vrot.slane %v322, 6
  %v326 = vadd.f32 %v122, %v324
  %v327 = vtanh.pop %v326
  %v328 = vsub.f32 1.0, %v310
  %v330 = vrot.slane %v327, 1
  %v332 = vmul.f32 %v328, %v330
  %334 = vrot.lane.b32.xlu0 %v281, 2
  %v335 = vpop.permute.xlu0 %334
  %v337 = vmul.f32 %v310, %v335
  %v338 = vadd.f32 %v332, %v337
  %v339 = vmul.f32 %v338, %v282
  %v341 = vrot.slane %v339, 1
  %342 = vrot.lane.b32.xlu0 %v341, 2
  %v343 = vpop.permute.xlu0 %342
  %v345 = vadd.f32 %v122, %v343
  %v346 = vadd.f32 %v345, %v222
  %v347 = vxor.u32 %v346, 2147483648
  %v348 = vmul.f32 %v347, 1.442695
  %v349 = vpow.pop %v348
  %v350 = vadd.f32 %v349, 1.0
  %v351 = vrcp.pop %v350
  %v352 = vmul.f32 1.0, %v351
  %v353 = vmul.f32 %v338, %v215
  %355 = vrot.lane.b32.xlu0 %v353, 2
  %v356 = vpop.permute.xlu0 %355
  %v358 = vadd.f32 %v122, %v356
  %v359 = vadd.f32 %v358, %v222
  %v360 = vxor.u32 %v359, 2147483648
  %v361 = vmul.f32 %v360, 1.442695
  %v362 = vpow.pop %v361
  %v363 = vadd.f32 %v362, 1.0
  %v364 = vrcp.pop %v363
  %v365 = vmul.f32 1.0, %v364
  %v366 = vmul.f32 %v338, %v311
  %v367 = vadd.f32 %v366, %v314
  %v369 = vrot.slane %v367, 1
  %370 = vrot.lane.b32.xlu0 %v369, 2
  %v371 = vpop.permute.xlu0 %370
  %v373 = vmul.f32 %v352, %v371
  %v375 = vrot.slane %v373, 6
  %v377 = vadd.f32 %v122, %v375
  %v378 = vtanh.pop %v377
  %v379 = vsub.f32 1.0, %v365
  %v381 = vrot.slane %v378, 1
  %v383 = vmul.f32 %v379, %v381
  %385 = vrot.lane.b32.xlu0 %v338, 2
  %v386 = vpop.permute.xlu0 %385
  %v388 = vmul.f32 %v365, %v386
  %v389 = vadd.f32 %v383, %v388
  %v390 = vmul.f32 %v389, %v282
  %v392 = vrot.slane %v390, 1
  %393 = vrot.lane.b32.xlu0 %v392, 2
  %v394 = vpop.permute.xlu0 %393
  %v396 = vadd.f32 %v122, %v394
  %v397 = vadd.f32 %v396, %v222
  %v398 = vxor.u32 %v397, 2147483648
  %v399 = vmul.f32 %v398, 1.442695
  %v400 = vpow.pop %v399
  %v401 = vadd.f32 %v400, 1.0
  %v402 = vrcp.pop %v401
  %v403 = vmul.f32 1.0, %v402
  %v404 = vmul.f32 %v389, %v215
  %406 = vrot.lane.b32.xlu0 %v404, 2
  %v407 = vpop.permute.xlu0 %406
  %v409 = vadd.f32 %v122, %v407
  %v410 = vadd.f32 %v409, %v222
  %v411 = vxor.u32 %v410, 2147483648
  %v412 = vmul.f32 %v411, 1.442695
  %v413 = vpow.pop %v412
  %v414 = vadd.f32 %v413, 1.0
  %v415 = vrcp.pop %v414
  %v416 = vmul.f32 1.0, %v415
  %v417 = vmul.f32 %v389, %v311
  %v418 = vadd.f32 %v417, %v314
  %v420 = vrot.slane %v418, 1
  %421 = vrot.lane.b32.xlu0 %v420, 2
  %v422 = vpop.permute.xlu0 %421
  %v424 = vmul.f32 %v403, %v422
  %v426 = vrot.slane %v424, 6
  %v428 = vadd.f32 %v122, %v426
  %v429 = vtanh.pop %v428
  %v430 = vsub.f32 1.0, %v416
  %v432 = vrot.slane %v429, 1
  %v434 = vmul.f32 %v430, %v432
  %436 = vrot.lane.b32.xlu0 %v389, 2
  %v437 = vpop.permute.xlu0 %436
  %v439 = vmul.f32 %v416, %v437
  %v440 = vadd.f32 %v434, %v439
  %v441 = vmul.f32 %v440, %v282
  %v443 = vrot.slane %v441, 1
  %444 = vrot.lane.b32.xlu0 %v443, 2
  %v445 = vpop.permute.xlu0 %444
  %v447 = vadd.f32 %v122, %v445
  %v448 = vadd.f32 %v447, %v222
  %v449 = vxor.u32 %v448, 2147483648
  %v450 = vmul.f32 %v449, 1.442695
  %v451 = vpow.pop %v450
  %v452 = vadd.f32 %v451, 1.0
  %v453 = vrcp.pop %v452
  %v454 = vmul.f32 1.0, %v453
  %v455 = vmul.f32 %v440, %v215
  %457 = vrot.lane.b32.xlu0 %v455, 2
  %v458 = vpop.permute.xlu0 %457
  %v460 = vadd.f32 %v122, %v458
  %v461 = vadd.f32 %v460, %v222
  %v462 = vxor.u32 %v461, 2147483648
  %v463 = vmul.f32 %v462, 1.442695
  %v464 = vpow.pop %v463
  %v465 = vadd.f32 %v464, 1.0
  %v466 = vrcp.pop %v465
  %v467 = vmul.f32 1.0, %v466
  %v468 = vmul.f32 %v440, %v311
  %v469 = vadd.f32 %v468, %v314
  %v471 = vrot.slane %v469, 1
  %472 = vrot.lane.b32.xlu0 %v471, 2
  %v473 = vpop.permute.xlu0 %472
  %v475 = vmul.f32 %v454, %v473
  %v477 = vrot.slane %v475, 6
  %v479 = vadd.f32 %v122, %v477
  %v480 = vtanh.pop %v479
  %v481 = vsub.f32 1.0, %v467
  %v483 = vrot.slane %v480, 1
  %v485 = vmul.f32 %v481, %v483
  %487 = vrot.lane.b32.xlu0 %v440, 2
  %v488 = vpop.permute.xlu0 %487
  %v490 = vmul.f32 %v467, %v488
  %v491 = vadd.f32 %v485, %v490
  %v492 = vmul.f32 %v491, %v282
  %v494 = vrot.slane %v492, 1
  %495 = vrot.lane.b32.xlu0 %v494, 2
  %v496 = vpop.permute.xlu0 %495
  %v498 = vadd.f32 %v122, %v496
  %v499 = vadd.f32 %v498, %v222
  %v500 = vxor.u32 %v499, 2147483648
  %v501 = vmul.f32 %v500, 1.442695
  %v502 = vpow.pop %v501
  %v503 = vadd.f32 %v502, 1.0
  %v504 = vrcp.pop %v503
  %v505 = vmul.f32 1.0, %v504
  %v506 = vmul.f32 %v491, %v215
  %508 = vrot.lane.b32.xlu0 %v506, 2
  %v509 = vpop.permute.xlu0 %508
  %v511 = vadd.f32 %v122, %v509
  %v512 = vadd.f32 %v511, %v222
  %v513 = vxor.u32 %v512, 2147483648
  %v514 = vmul.f32 %v513, 1.442695
  %v515 = vpow.pop %v514
  %v516 = vadd.f32 %v515, 1.0
  %v517 = vrcp.pop %v516
  %v518 = vmul.f32 1.0, %v517
  %v519 = vmul.f32 %v491, %v311
  %v520 = vadd.f32 %v519, %v314
  %v522 = vrot.slane %v520, 1
  %523 = vrot.lane.b32.xlu0 %v522, 2
  %v524 = vpop.permute.xlu0 %523
  %v526 = vmul.f32 %v505, %v524
  %v528 = vrot.slane %v526, 6
  %v530 = vadd.f32 %v122, %v528
  %v531 = vtanh.pop %v530
  %v532 = vsub.f32 1.0, %v518
  %v534 = vrot.slane %v531, 1
  %v536 = vmul.f32 %v532, %v534
  %538 = vrot.lane.b32.xlu0 %v491, 2
  %v539 = vpop.permute.xlu0 %538
  %v541 = vmul.f32 %v518, %v539
  %v542 = vadd.f32 %v536, %v541
  %v543 = vmul.f32 %v542, %v282
  %v545 = vrot.slane %v543, 1
  %546 = vrot.lane.b32.xlu0 %v545, 2
  %v547 = vpop.permute.xlu0 %546
  %v549 = vadd.f32 %v122, %v547
  %v550 = vadd.f32 %v549, %v222
  %v551 = vxor.u32 %v550, 2147483648
  %v552 = vmul.f32 %v551, 1.442695
  %v553 = vpow.pop %v552
  %v554 = vadd.f32 %v553, 1.0
  %v555 = vrcp.pop %v554
  %v556 = vmul.f32 1.0, %v555
  %v557 = vmul.f32 %v542, %v215
  %559 = vrot.lane.b32.xlu0 %v557, 2
  %v560 = vpop.permute.xlu0 %559
  %v562 = vadd.f32 %v122, %v560
  %v563 = vadd.f32 %v562, %v222
  %v564 = vxor.u32 %v563, 2147483648
  %v565 = vmul.f32 %v564, 1.442695
  %v566 = vpow.pop %v565
  %v567 = vadd.f32 %v566, 1.0
  %v568 = vrcp.pop %v567
  %v569 = vmul.f32 1.0, %v568
  %v570 = vmul.f32 %v542, %v311
  %v571 = vadd.f32 %v570, %v314
  %v573 = vrot.slane %v571, 1
  %574 = vrot.lane.b32.xlu0 %v573, 2
  %v575 = vpop.permute.xlu0 %574
  %v577 = vmul.f32 %v556, %v575
  %v579 = vrot.slane %v577, 6
  %v581 = vadd.f32 %v122, %v579
  %v582 = vtanh.pop %v581
  %v583 = vsub.f32 1.0, %v569
  %v585 = vrot.slane %v582, 1
  %v587 = vmul.f32 %v583, %v585
  %589 = vrot.lane.b32.xlu0 %v542, 2
  %v590 = vpop.permute.xlu0 %589
  %v592 = vmul.f32 %v569, %v590
  %v593 = vadd.f32 %v587, %v592
  %v594 = vmul.f32 %v593, %v282
  %v596 = vrot.slane %v594, 1
  %597 = vrot.lane.b32.xlu0 %v596, 2
  %v598 = vpop.permute.xlu0 %597
  %v600 = vadd.f32 %v122, %v598
  %v601 = vadd.f32 %v600, %v222
  %v602 = vxor.u32 %v601, 2147483648
  %v603 = vmul.f32 %v602, 1.442695
  %v604 = vpow.pop %v603
  %v605 = vadd.f32 %v604, 1.0
  %v606 = vrcp.pop %v605
  %v607 = vmul.f32 1.0, %v606
  %v608 = vmul.f32 %v593, %v215
  %610 = vrot.lane.b32.xlu0 %v608, 2
  %v611 = vpop.permute.xlu0 %610
  %v613 = vadd.f32 %v122, %v611
  %v614 = vadd.f32 %v613, %v222
  %v615 = vxor.u32 %v614, 2147483648
  %v616 = vmul.f32 %v615, 1.442695
  %v617 = vpow.pop %v616
  %v618 = vadd.f32 %v617, 1.0
  %v619 = vrcp.pop %v618
  %v620 = vmul.f32 1.0, %v619
  %v621 = vmul.f32 %v593, %v311
  %v622 = vadd.f32 %v621, %v314
  %v624 = vrot.slane %v622, 1
  %625 = vrot.lane.b32.xlu0 %v624, 2
  %v626 = vpop.permute.xlu0 %625
  %v628 = vmul.f32 %v607, %v626
  %v630 = vrot.slane %v628, 6
  %v632 = vadd.f32 %v122, %v630
  %v633 = vtanh.pop %v632
  %v634 = vsub.f32 1.0, %v620
  %v636 = vrot.slane %v633, 1
  %v638 = vmul.f32 %v634, %v636
  %640 = vrot.lane.b32.xlu0 %v593, 2
  %v641 = vpop.permute.xlu0 %640
  %v643 = vmul.f32 %v620, %v641
  %v644 = vadd.f32 %v638, %v643
  %v645 = vrot.slane %v281, 1
  %647 = vrot.lane.b32.xlu0 %v338, 126
  %v648 = vpop.permute.xlu0 %647
  %v650 = vrot.slane %v389, 7
  %651 = vrot.lane.b32.xlu0 %v650, 124
  %v652 = vpop.permute.xlu0 %651
  %v654 = vrot.slane %v440, 6
  %655 = vrot.lane.b32.xlu0 %v654, 122
  %v656 = vpop.permute.xlu0 %655
  %v658 = vrot.slane %v491, 5
  %659 = vrot.lane.b32.xlu0 %v658, 120
  %v660 = vpop.permute.xlu0 %659
  %v662 = vrot.slane %v542, 4
  %663 = vrot.lane.b32.xlu0 %v662, 118
  %v664 = vpop.permute.xlu0 %663
  %v666 = vrot.slane %v593, 3
  %667 = vrot.lane.b32.xlu0 %v666, 116
  %v668 = vpop.permute.xlu0 %667
  %v671 = vrot.slane %v644, 2
  %672 = vrot.lane.b32.xlu0 %v671, 114
  %v673 = vpop.permute.xlu0 %672
  %vm675 = vcmask 1040384
  %v676 = vsel %vm675, %v645, %v648
  %vm677 = vcmask 1041408
  %v678 = vsel %vm677, %v676, %v652
  %vm679 = vcmask 1042432
  %v680 = vsel %vm679, %v678, %v656
  %vm681 = vcmask 1043456
  %v682 = vsel %vm681, %v680, %v660
  %v683 = vsel %vm51, %v682, %v664
  %vm684 = vcmask 1045504
  %v685 = vsel %vm684, %v683, %v668
  %vm686 = vcmask 1046528
  %v687 = vsel %vm686, %v685, %v673
  %v688 = vld [vmem:[#allocation2] sm:$0x1]
  %v690 = vlaneseq
  %v691 = vshrl.u32 %v690, 7
  %v692 = vsub.s32 0, %v691
  %v693 = vrot.slane %v688, %v692
  %694 = vset.pattern.permute.xlu0 0
  %695 = vperm.xlu0 %694, %v693
  %v696 = vpop.permute.xlu0 %695
  %v698 = vmul.f32 %v687, %v696
  %v699 = vadd.f32 %v698, %v208
  %v700 = vld [vmem:[#allocation3] sm:$0x1]
  %v702 = vlaneseq
  %v703 = vshrl.u32 %v702, 7
  %v704 = vsub.s32 0, %v703
  %v705 = vrot.slane %v700, %v704
  %706 = vset.pattern.permute.xlu0 0
  %707 = vperm.xlu0 %706, %v705
  %v708 = vpop.permute.xlu0 %707
  %v710 = vadd.f32 %v699, %v708
  %711 = vst.msk [vmem:[%s10] sm:$0xff] %vm197, %v710
  // Predicated region
  $region42: #{tpu_custom_call.1} parent=0 // pred_check
    _
  $region43: #{tpu_custom_call.1} parent=0 // pred_check_branch
    %713 = sbr.rel (0) target = $region45
  $region44: #{tpu_custom_call.1} parent=0 // pred_region
    _
  $region45: #{tpu_custom_call.1} parent=0 // pred_fallthru
    _
  // Predicated region
  $region46: #{tpu_custom_call.1} parent=0 // pred_check
    _
  $region47: #{tpu_custom_call.1} parent=0 // pred_check_branch
    %715 = sbr.rel (0) target = $region49
  $region48: #{tpu_custom_call.1} parent=0 // pred_region
    _
  $region49: #{tpu_custom_call.1} parent=0 // pred_fallthru
    _

</llo_original>
